<compile_context>
chip_gen: v7x
topology: tpu7x:2x2x1
jax: 0.10.0
libtpu: 0.0.40
codegen_flags: <defaults>
</compile_context>

<pallas_src>
import functools
import math

import jax
import jax.numpy as jnp
from jax import lax
from jax.experimental import pallas as pl
from jax.experimental.pallas import tpu as pltpu

EPS = 1e-5          # self.eps buffer
VAR_MIN = 1e-8      # torch.clamp(var, min=1e-08)

_TILE_BYTES = 4 * 1024 * 1024          # streamed tile target (in the I/O dtype)
_MIN_TILE_BYTES = 512 * 1024           # keep streamed tiles at least this big
_FUSED_CHUNK_BYTES = 2 * 1024 * 1024   # f32 chunk size inside the fused kernel
_MAX_PACKED_W = 4096                   # cap on packed lane width


def _cdiv(a, b):
    return -(-a // b)


def _round_up(x, m):
    return _cdiv(x, m) * m


def _vmem_capacity_bytes():
    try:
        info = pltpu.get_tpu_info()
        cap = getattr(info, "vmem_capacity_bytes", None)
        if cap:
            return int(cap)
    except Exception:
        pass
    return 64 * 1024 * 1024   # conservative default (v7x per-core VMEM)


_VMEM_CAP = _vmem_capacity_bytes()
# ~48 MiB on v7x (64 MiB VMEM), ~96 MiB on v5e/v6e (128 MiB VMEM).
_VMEM_LIMIT = min(_VMEM_CAP * 3 // 4, 100 * 1024 * 1024)
# Fused-resident threshold: leave headroom for chunk temporaries + small operands.
_RESIDENT_BYTES = max(4 * 1024 * 1024, _VMEM_LIMIT - 16 * 1024 * 1024)


# ----------------------------------------------------------------------------
# Lane packing: fold g rows into the lane axis so that w = g * F is a multiple
# of 128 (g = 128 / gcd(F, 128), always a power of two).  This is a free
# row-major reshape; only used when g divides the row count exactly.
# ----------------------------------------------------------------------------
def _pack_factor(f, n_rows):
    if f % 128 == 0:
        return 1
    g = 128 // math.gcd(f, 128)
    if g <= 1 or f * g > _MAX_PACKED_W or n_rows % g != 0:
        return 1
    return g


# ----------------------------------------------------------------------------
# Tiling helpers.
# ----------------------------------------------------------------------------
def _track_tiling(np_rows, w, itemsize):
    """Returns (nc_shards, tile_rows, ragged)."""
    bytes_cap = max(8, (_TILE_BYTES // (w * itemsize)) // 8 * 8)
    for nc in (2, 1):   # prefer a 2-way shard (v7x megacore) when it divides
        hi = min(bytes_cap,
                 max(8, _round_up(_cdiv(np_rows, nc * 8), 8)),   # >= ~8 steps/shard
                 (np_rows // nc) // 8 * 8)
        t = hi
        while t >= 8:
            if np_rows % (nc * t) == 0:
                return nc, t, False
            t -= 8
    # Ragged fallback: single shard, masked tail tile.
    tm = max(8, min(bytes_cap, _round_up(_cdiv(np_rows, 8), 8)))
    return 1, tm, True


def _stream_rows(np_rows, w, itemsize):
    bytes_cap = max(8, (_TILE_BYTES // (w * itemsize)) // 8 * 8)
    lo = max(8, min(bytes_cap, (_MIN_TILE_BYTES // (w * itemsize)) // 8 * 8))
    tm = min(bytes_cap, max(lo, _round_up(_cdiv(np_rows, 8), 8)))
    return max(8, min(tm, _round_up(np_rows, 8)))


# ----------------------------------------------------------------------------
# Kernel 1: fused track + normalize (training, x resident in VMEM).
# One HBM read and one HBM write of x.  Input/output DMAs are chunked and
# double-buffered so the reductions / normalization overlap the transfers.
# ----------------------------------------------------------------------------
def _fused_kernel(count_ref, mean_ref, m2_ref, x_hbm, out_hbm,
                  nmean_ref, nm2_ref, xbuf, s1_ref, s2_ref, sem,
                  *, np_rows, g, f, n_samples, cm_rows, out_dtype):
    n_full = np_rows // cm_rows
    rem = np_rows - n_full * cm_rows

    def in_copy(start, size, slot):
        return pltpu.make_async_copy(x_hbm.at[pl.ds(start, size)],
                                     xbuf.at[pl.ds(start, size)],
                                     sem.at[slot])

    def out_copy(start, size, slot):
        return pltpu.make_async_copy(xbuf.at[pl.ds(start, size)],
                                     out_hbm.at[pl.ds(start, size)],
                                     sem.at[slot])

    # ---- phase 1: stream x in, accumulate per-lane sum(x), sum(x*x) --------
    if n_full > 0:
        in_copy(0, cm_rows, 0).start()
    if rem > 0:
        # Tail chunk DMA is issued up front; it overlaps the whole main loop.
        in_copy(n_full * cm_rows, rem, 2).start()

    s1_ref[...] = jnp.zeros_like(s1_ref)
    s2_ref[...] = jnp.zeros_like(s2_ref)

    if n_full > 0:
        @pl.loop(0, n_full)
        def _(i):
            @pl.when(i + 1 < n_full)
            def _():
                nxt = pl.multiple_of((i + 1) * cm_rows, 8)
                in_copy(nxt, cm_rows, (i + 1) % 2).start()
            start = pl.multiple_of(i * cm_rows, 8)
            in_copy(start, cm_rows, i % 2).wait()
            xc = xbuf[pl.ds(start, cm_rows), :].astype(jnp.float32)
            s1_ref[...] += xc.sum(axis=0, keepdims=True)
            s2_ref[...] += (xc * xc).sum(axis=0, keepdims=True)

    if rem > 0:
        start = n_full * cm_rows
        in_copy(start, rem, 2).wait()
        xc = xbuf[pl.ds(start, rem), :].astype(jnp.float32)
        s1_ref[...] += xc.sum(axis=0, keepdims=True)
        s2_ref[...] += (xc * xc).sum(axis=0, keepdims=True)

    # ---- phase 2: per-feature running-stat update (tiny) --------------------
    # Fold the g packed lane-groups so every lane holds its feature's total
    # (log fold via XLU rotates; g is always a power of two).
    t1 = s1_ref[...]
    t2 = s2_ref[...]
    step = g
    while step > 1:
        step //= 2
        t1 = t1 + pltpu.roll(t1, shift=step * f, axis=1)
        t2 = t2 + pltpu.roll(t2, shift=step * f, axis=1)

    nsf = float(n_samples)
    count_new = count_ref[0].astype(jnp.float32) + nsf
    mean_old = mean_ref[...]
    sum_delta = t1 - nsf * mean_old
    mean_new = mean_old + sum_delta / count_new
    # sum(delta * (x - mean_new)) expressed with the raw moments.
    m2_new = (m2_ref[...] + t2 - (mean_new + mean_old) * t1
              + nsf * mean_old * mean_new)
    nmean_ref[...] = mean_new
    nm2_ref[...] = m2_new

    var = jnp.maximum(m2_new / jnp.maximum(count_new, 1.0) + EPS, VAR_MIN)
    inv_std = lax.rsqrt(var)
    use_norm = count_new >= 2.0
    shift = jnp.where(use_norm, mean_new, jnp.zeros_like(mean_new))
    scale = jnp.where(use_norm, inv_std, jnp.ones_like(inv_std))

    # ---- phase 3: normalize resident copy in place and stream it out -------
    if n_full > 0:
        @pl.loop(0, n_full)
        def _(i):
            start = pl.multiple_of(i * cm_rows, 8)
            @pl.when(i >= 2)
            def _():
                prev = pl.multiple_of((i - 2) * cm_rows, 8)
                out_copy(prev, cm_rows, i % 2).wait()
            xc = xbuf[pl.ds(start, cm_rows), :].astype(jnp.float32)
            xbuf[pl.ds(start, cm_rows), :] = ((xc - shift) * scale).astype(out_dtype)
            out_copy(start, cm_rows, i % 2).start()

        for j in range(max(0, n_full - 2), n_full):
            out_copy(j * cm_rows, cm_rows, j % 2).wait()

    if rem > 0:
        start = n_full * cm_rows
        xc = xbuf[pl.ds(start, rem), :].astype(jnp.float32)
        xbuf[pl.ds(start, rem), :] = ((xc - shift) * scale).astype(out_dtype)
        cp = out_copy(start, rem, 2)
        cp.start()
        cp.wait()


def _fused_track_normalize(x_packed, count, mean_w, m2_w, *, n_samples, g, f):
    np_rows, w = x_packed.shape
    out_dtype = x_packed.dtype
    cm_rows = max(8, (_FUSED_CHUNK_BYTES // (w * 4)) // 8 * 8)

    kernel = functools.partial(
        _fused_kernel, np_rows=np_rows, g=g, f=f, n_samples=n_samples,
        cm_rows=cm_rows, out_dtype=out_dtype)

    count_arr = jnp.asarray(count, dtype=jnp.int32).reshape(1)

    return pl.pallas_call(
        kernel,
        out_shape=(jax.ShapeDtypeStruct((np_rows, w), out_dtype),
                   jax.ShapeDtypeStruct((1, w), jnp.float32),
                   jax.ShapeDtypeStruct((1, w), jnp.float32)),
        grid_spec=pltpu.PrefetchScalarGridSpec(
            num_scalar_prefetch=1,
            grid=(1,),
            in_specs=[
                pl.BlockSpec((1, w), lambda i, c: (0, 0)),   # running mean (tiled)
                pl.BlockSpec((1, w), lambda i, c: (0, 0)),   # running M2 (tiled)
                pl.BlockSpec(memory_space=pl.ANY),           # x, stays in HBM
            ],
            out_specs=[
                pl.BlockSpec(memory_space=pl.ANY),           # out, written via DMA
                pl.BlockSpec((1, w), lambda i, c: (0, 0)),   # new mean (tiled)
                pl.BlockSpec((1, w), lambda i, c: (0, 0)),   # new M2 (tiled)
            ],
            scratch_shapes=[
                pltpu.VMEM((_round_up(np_rows, 8), w), out_dtype),   # resident x
                pltpu.VMEM((1, w), jnp.float32),
                pltpu.VMEM((1, w), jnp.float32),
                pltpu.SemaphoreType.DMA((3,)),
            ],
        ),
        compiler_params=pltpu.CompilerParams(
            dimension_semantics=("arbitrary",),
            vmem_limit_bytes=_VMEM_LIMIT),
    )(count_arr, mean_w, m2_w, x_packed)


# ----------------------------------------------------------------------------
# Kernel 2: streamed track() reductions (x too big to stay resident).
# Accumulates per-lane raw moments sum(x), sum(x*x); the tiny per-feature
# mean/M2 update is done in JAX glue.
# ----------------------------------------------------------------------------
def _track_kernel(x_ref, s1_ref, s2_ref, a1_ref, a2_ref, *, np_rows, tm, ragged):
    i = pl.program_id(1)

    @pl.when(i == 0)
    def _():
        a1_ref[...] = jnp.zeros_like(a1_ref)
        a2_ref[...] = jnp.zeros_like(a2_ref)

    x = x_ref[...].astype(jnp.float32)
    if ragged:
        # Last tile overhangs the array: zero out the padded rows.
        blk = pl.program_id(0) * pl.num_programs(1) + i
        rows_valid = np_rows - blk * tm
        rid = lax.broadcasted_iota(jnp.int32, x.shape, 0)
        x = jnp.where(rid < rows_valid, x, 0.0)
    a1_ref[...] += x.sum(axis=0, keepdims=True)
    a2_ref[...] += (x * x).sum(axis=0, keepdims=True)

    @pl.when(i == pl.num_programs(1) - 1)
    def _():
        s1_ref[...] = a1_ref[...][None]
        s2_ref[...] = a2_ref[...][None]


def _track_sums(x_packed):
    np_rows, w = x_packed.shape
    itemsize = jnp.dtype(x_packed.dtype).itemsize
    nc, tm, ragged = _track_tiling(np_rows, w, itemsize)
    nb = _cdiv(np_rows, tm)
    steps = _cdiv(nb, nc)    # exact (nb == nc * steps) whenever not ragged

    kernel = functools.partial(_track_kernel, np_rows=np_rows, tm=tm, ragged=ragged)
    return pl.pallas_call(
        kernel,
        out_shape=(jax.ShapeDtypeStruct((nc, 1, w), jnp.float32),
                   jax.ShapeDtypeStruct((nc, 1, w), jnp.float32)),
        grid_spec=pltpu.PrefetchScalarGridSpec(
            num_scalar_prefetch=0,
            grid=(nc, steps),
            in_specs=[pl.BlockSpec((tm, w), lambda c, i: (c * steps + i, 0))],
            out_specs=[pl.BlockSpec((1, 1, w), lambda c, i: (c, 0, 0)),
                       pl.BlockSpec((1, 1, w), lambda c, i: (c, 0, 0))],
            scratch_shapes=[pltpu.VMEM((1, w), jnp.float32),
                            pltpu.VMEM((1, w), jnp.float32)],
        ),
        compiler_params=pltpu.CompilerParams(
            dimension_semantics=("parallel", "arbitrary"),
            vmem_limit_bytes=_VMEM_LIMIT),
    )(x_packed)


# ----------------------------------------------------------------------------
# Kernel 3: streamed normalization -- pure (x - shift) * scale FMA.
# shift/scale precomputed per feature (identity when count < 2) and packed
# into one (2, w) resident operand.
# ----------------------------------------------------------------------------
def _normalize_kernel(x_ref, ss_ref, out_ref):
    x = x_ref[...].astype(jnp.float32)
    shift = ss_ref[0:1, :]
    scale = ss_ref[1:2, :]
    out_ref[...] = ((x - shift) * scale).astype(out_ref.dtype)


def _normalize(x_packed, shift_scale):
    np_rows, w = x_packed.shape
    itemsize = jnp.dtype(x_packed.dtype).itemsize
    tm = _stream_rows(np_rows, w, itemsize)
    grid = (_cdiv(np_rows, tm),)
    return pl.pallas_call(
        _normalize_kernel,
        out_shape=jax.ShapeDtypeStruct((np_rows, w), x_packed.dtype),
        grid_spec=pltpu.PrefetchScalarGridSpec(
            num_scalar_prefetch=0,
            grid=grid,
            in_specs=[pl.BlockSpec((tm, w), lambda i: (i, 0)),
                      pl.BlockSpec((2, w), lambda i: (0, 0))],
            out_specs=pl.BlockSpec((tm, w), lambda i: (i, 0)),
        ),
        compiler_params=pltpu.CompilerParams(
            # Single parallel row-block axis: megacore partitioning splits it
            # across the two TensorCores on v7x.
            dimension_semantics=("parallel",),
            vmem_limit_bytes=_VMEM_LIMIT),
    )(x_packed, shift_scale)


# ----------------------------------------------------------------------------
# Module-equivalent wrapper (functional: buffers passed in / new buffers out).
# ----------------------------------------------------------------------------
def running_norm_forward(x, count, mean, M2, *, training=True,
                         max_resident_bytes=None):
    if max_resident_bytes is None:
        max_resident_bytes = _RESIDENT_BYTES

    orig_shape = x.shape
    orig_dtype = x.dtype
    f = orig_shape[-1]
    n = 1
    for d in orig_shape[:-1]:
        n *= int(d)

    mean_f32 = mean.astype(jnp.float32)
    M2_f32 = M2.astype(jnp.float32)

    g = _pack_factor(f, n)
    w = f * g
    np_rows = n // g
    x_packed = x.reshape(np_rows, w)     # row-major layout-preserving: free
    itemsize = jnp.dtype(orig_dtype).itemsize
    x_bytes = np_rows * w * itemsize

    if training and x_bytes <= max_resident_bytes:
        # Fused single-pass path: x read from HBM once, kept resident in VMEM.
        mean_w = jnp.tile(mean_f32, g).reshape(1, w)
        m2_w = jnp.tile(M2_f32, g).reshape(1, w)
        out_packed, nmean_w, nm2_w = _fused_track_normalize(
            x_packed, count, mean_w, m2_w, n_samples=n, g=g, f=f)
        count = count + n
        mean_f32 = nmean_w[0, :f]
        M2_f32 = nm2_w[0, :f]
        return out_packed.reshape(orig_shape), (count, mean_f32, M2_f32)

    if training:
        # Streamed track: per-lane raw moments, folded per feature in glue.
        s1, s2 = _track_sums(x_packed)
        sum_x = s1.reshape(-1, f).sum(axis=0)
        sum_x2 = s2.reshape(-1, f).sum(axis=0)
        count = count + n
        cnt_f = count.astype(jnp.float32)
        sum_delta = sum_x - n * mean_f32
        mean_new = mean_f32 + sum_delta / cnt_f
        M2_f32 = (M2_f32 + sum_x2 - (mean_new + mean_f32) * sum_x
                  + n * mean_f32 * mean_new)
        mean_f32 = mean_new

    # Per-feature normalization constants (tiny; identity when count < 2).
    cnt_f = jnp.maximum(count.astype(jnp.float32), 1.0)
    var = jnp.maximum(M2_f32 / cnt_f + EPS, VAR_MIN)
    inv_std = lax.rsqrt(var)
    use_norm = count >= 2
    shift = jnp.where(use_norm, mean_f32, 0.0)
    scale = jnp.where(use_norm, inv_std, 1.0)
    shift_scale = jnp.concatenate(
        [jnp.tile(shift, g), jnp.tile(scale, g)]).reshape(2, w)

    out_packed = _normalize(x_packed, shift_scale)
    return out_packed.reshape(orig_shape), (count, mean_f32, M2_f32)


# ----------------------------------------------------------------------------
# Pure-JAX reference (mirrors the PyTorch forward) for correctness checks.
# ----------------------------------------------------------------------------
def _ref_forward(x, count, mean, M2, training=True):
    f = x.shape[-1]
    x2d = x.reshape(-1, f).astype(jnp.float32)
    if training:
        count = count + x2d.shape[0]
        delta = x2d - mean
        mean = mean + delta.sum(0) / count.astype(jnp.float32)
        M2 = M2 + (delta * (x2d - mean)).sum(0)
    if int(count) < 2:
        return x, (count, mean, M2)
    var = jnp.maximum(M2 / count.astype(jnp.float32) + EPS, VAR_MIN)
    out = (x.astype(jnp.float32) - mean) / jnp.sqrt(var)
    return out.astype(x.dtype), (count, mean, M2)


if __name__ == "__main__":
    key = jax.random.PRNGKey(0)
    batch, seq, hidden = 2, 8, 32          # num_features = 32
    k1, k2, k3 = jax.random.split(key, 3)
    x1 = jax.random.normal(k1, (batch, seq, hidden), dtype=jnp.float32)
    x2 = 0.5 * jax.random.normal(k2, (batch, seq, hidden), dtype=jnp.float32) + 1.0
    x3 = jax.random.normal(k3, (3, 12, hidden), dtype=jnp.float32) + 0.25

    def check(out, stats, ref_out, ref_stats, check_out=True):
        c, m, v = stats
        rc, rm, rv = ref_stats
        assert int(c) == int(rc)
        assert jnp.allclose(m, rm, rtol=1e-5, atol=1e-5)
        assert jnp.allclose(v, rv, rtol=1e-4, atol=1e-4)
        if check_out:
            assert jnp.allclose(out, ref_out, rtol=1e-4, atol=1e-5)

    # Deterministic buffer init (matches RunningNorm.__init__).
    count = jnp.array(0, dtype=jnp.int32)
    mean = jnp.zeros((hidden,), dtype=jnp.float32)
    M2 = jnp.zeros((hidden,), dtype=jnp.float32)
    r_count, r_mean, r_M2 = count, mean, M2

    # --- training step 1 (fused resident path) ---
    out, (count, mean, M2) = running_norm_forward(x1, count, mean, M2, training=True)
    jax.block_until_ready(out)
    ref_out, (r_count, r_mean, r_M2) = _ref_forward(x1, r_count, r_mean, r_M2, training=True)
    check(out, (count, mean, M2), ref_out, (r_count, r_mean, r_M2))

    # --- training step 2 (fused, nonzero running mean) ---
    out, (count, mean, M2) = running_norm_forward(x2, count, mean, M2, training=True)
    jax.block_until_ready(out)
    ref_out, (r_count, r_mean, r_M2) = _ref_forward(x2, r_count, r_mean, r_M2, training=True)
    check(out, (count, mean, M2), ref_out, (r_count, r_mean, r_M2))

    # --- eval step (streamed normalize only) ---
    out, _ = running_norm_forward(x1, count, mean, M2, training=False)
    jax.block_until_ready(out)
    ref_out, _ = _ref_forward(x1, r_count, r_mean, r_M2, training=False)
    assert jnp.allclose(out, ref_out, rtol=1e-4, atol=1e-5)

    # --- streamed (non-resident) training path, exact tiling ---
    out_s, st_s = running_norm_forward(x2, count, mean, M2, training=True,
                                       max_resident_bytes=0)
    jax.block_until_ready(out_s)
    ref_out_s, ref_st_s = _ref_forward(x2, r_count, r_mean, r_M2, training=True)
    check(out_s, st_s, ref_out_s, ref_st_s)

    # --- streamed training path with a ragged (masked) tail tile ---
    c0 = jnp.array(5, dtype=jnp.int32)
    m0 = jnp.full((hidden,), 0.3, dtype=jnp.float32)
    v0 = jnp.full((hidden,), 2.0, dtype=jnp.float32)
    out_r, st_r = running_norm_forward(x3, c0, m0, v0, training=True,
                                       max_resident_bytes=0)
    jax.block_until_ready(out_r)
    ref_out_r, ref_st_r = _ref_forward(x3, c0, m0, v0, training=True)
    check(out_r, st_r, ref_out_r, ref_st_r)

    print("KERNEL_OK")
</pallas_src>

<mosaic_0001>
module attributes {stable_mosaic.version = 11 : i64} {
  func.func @_fused_kernel(%arg0: i32, %arg1: memref<1xi32, #tpu.memory_space<smem>>, %arg2: memref<1x128xf32, #tpu.memory_space<vmem>>, %arg3: memref<1x128xf32, #tpu.memory_space<vmem>>, %arg4: memref<4x128xf32, #tpu.memory_space<any>>, %arg5: memref<4x128xf32, #tpu.memory_space<any>>, %arg6: memref<1x128xf32, #tpu.memory_space<vmem>>, %arg7: memref<1x128xf32, #tpu.memory_space<vmem>>, %arg8: memref<8x128xf32, #tpu.memory_space<vmem>>, %arg9: memref<1x128xf32, #tpu.memory_space<vmem>>, %arg10: memref<1x128xf32, #tpu.memory_space<vmem>>, %arg11: memref<3x!tpu.dma_semaphore, #tpu.memory_space<semaphore_mem>>) attributes {dimension_semantics = [#tpu.dimension_semantics<arbitrary>], iteration_bounds = array<i64: 1>, scalar_prefetch = 1 : i64, scratch_operands = 4 : i64, tpu.core_type = #tpu.core_type<tc>, window_params = [{pipeline_mode = #tpu.pipeline_mode<synchronous>, transform_indices = @transform_0, window_bounds = array<i64: 1, 128>}, {pipeline_mode = #tpu.pipeline_mode<synchronous>, transform_indices = @transform_1, window_bounds = array<i64: 1, 128>}, {}, {}, {pipeline_mode = #tpu.pipeline_mode<synchronous>, transform_indices = @transform_4, window_bounds = array<i64: 1, 128>}, {pipeline_mode = #tpu.pipeline_mode<synchronous>, transform_indices = @transform_5, window_bounds = array<i64: 1, 128>}]} {
    %c2_i32 = arith.constant 2 : i32
    %c0_i32 = arith.constant 0 : i32
    %c0_i32_0 = arith.constant 0 : i32
    %0 = tpu.memref_slice %arg4[%c0_i32, %c0_i32_0] : memref<4x128xf32, #tpu.memory_space<any>> -> memref<4x128xf32, #tpu.memory_space<any>>
    %c0_i32_1 = arith.constant 0 : i32
    %c0_i32_2 = arith.constant 0 : i32
    %1 = tpu.memref_slice %arg8[%c0_i32_1, %c0_i32_2] : memref<8x128xf32, #tpu.memory_space<vmem>> -> memref<4x128xf32, #tpu.memory_space<vmem>>
    %2 = tpu.memref_slice %arg11[%c2_i32] : memref<3x!tpu.dma_semaphore, #tpu.memory_space<semaphore_mem>> -> memref<1x!tpu.dma_semaphore, #tpu.memory_space<semaphore_mem>>
    %3 = tpu.memref_squeeze %2 : memref<1x!tpu.dma_semaphore, #tpu.memory_space<semaphore_mem>> -> memref<!tpu.dma_semaphore, #tpu.memory_space<semaphore_mem>>
    tpu.enqueue_dma source(%0 : memref<4x128xf32, #tpu.memory_space<any>>) target(%1 : memref<4x128xf32, #tpu.memory_space<vmem>>) target_semaphore(%3 : memref<!tpu.dma_semaphore, #tpu.memory_space<semaphore_mem>>)
    %cst = arith.constant 0.000000e+00 : f32
    %4 = vector.broadcast %cst : f32 to vector<1x128xf32>
    %c0 = arith.constant 0 : index
    %c0_3 = arith.constant 0 : index
    %5 = vector.load %arg9[%c0, %c0_3] : memref<1x128xf32, #tpu.memory_space<vmem>>, vector<1x128xf32>
    tpu.vector_store %arg9[%c0, %c0_3], %4 {strides = array<i32>} : memref<1x128xf32, #tpu.memory_space<vmem>>, vector<1x128xf32>,
    %cst_4 = arith.constant 0.000000e+00 : f32
    %6 = vector.broadcast %cst_4 : f32 to vector<1x128xf32>
    %c0_5 = arith.constant 0 : index
    %c0_6 = arith.constant 0 : index
    %7 = vector.load %arg10[%c0_5, %c0_6] : memref<1x128xf32, #tpu.memory_space<vmem>>, vector<1x128xf32>
    tpu.vector_store %arg10[%c0_5, %c0_6], %6 {strides = array<i32>} : memref<1x128xf32, #tpu.memory_space<vmem>>, vector<1x128xf32>,
    %c2_i32_7 = arith.constant 2 : i32
    %c0_i32_8 = arith.constant 0 : i32
    %c0_i32_9 = arith.constant 0 : i32
    %8 = tpu.memref_slice %arg4[%c0_i32_8, %c0_i32_9] : memref<4x128xf32, #tpu.memory_space<any>> -> memref<4x128xf32, #tpu.memory_space<any>>
    %c0_i32_10 = arith.constant 0 : i32
    %c0_i32_11 = arith.constant 0 : i32
    %9 = tpu.memref_slice %arg8[%c0_i32_10, %c0_i32_11] : memref<8x128xf32, #tpu.memory_space<vmem>> -> memref<4x128xf32, #tpu.memory_space<vmem>>
    %10 = tpu.memref_slice %arg11[%c2_i32_7] : memref<3x!tpu.dma_semaphore, #tpu.memory_space<semaphore_mem>> -> memref<1x!tpu.dma_semaphore, #tpu.memory_space<semaphore_mem>>
    %11 = tpu.memref_squeeze %10 : memref<1x!tpu.dma_semaphore, #tpu.memory_space<semaphore_mem>> -> memref<!tpu.dma_semaphore, #tpu.memory_space<semaphore_mem>>
    tpu.wait_dma2 semaphore(%11 : memref<!tpu.dma_semaphore, #tpu.memory_space<semaphore_mem>>) src(%8 : memref<4x128xf32, #tpu.memory_space<any>>) dst(%9 : memref<4x128xf32, #tpu.memory_space<vmem>>)
    %c0_12 = arith.constant 0 : index
    %c0_13 = arith.constant 0 : index
    %12 = vector.load %arg8[%c0_12, %c0_13] : memref<8x128xf32, #tpu.memory_space<vmem>>, vector<4x128xf32>
    %c0_14 = arith.constant 0 : index
    %c0_15 = arith.constant 0 : index
    %13 = vector.load %arg9[%c0_14, %c0_15] : memref<1x128xf32, #tpu.memory_space<vmem>>, vector<1x128xf32>
    %cst_16 = arith.constant dense<0.000000e+00> : vector<128xf32>
    %14 = vector.multi_reduction <add>, %12, %cst_16 [0] : vector<4x128xf32> to vector<128xf32>
    %15 = vector.shape_cast %14 : vector<128xf32> to vector<1x128xf32>
    %16 = arith.addf %13, %15 : vector<1x128xf32>
    %c0_17 = arith.constant 0 : index
    %c0_18 = arith.constant 0 : index
    %17 = vector.load %arg9[%c0_17, %c0_18] : memref<1x128xf32, #tpu.memory_space<vmem>>, vector<1x128xf32>
    tpu.vector_store %arg9[%c0_17, %c0_18], %16 {strides = array<i32>} : memref<1x128xf32, #tpu.memory_space<vmem>>, vector<1x128xf32>,
    %c0_19 = arith.constant 0 : index
    %c0_20 = arith.constant 0 : index
    %18 = vector.load %arg10[%c0_19, %c0_20] : memref<1x128xf32, #tpu.memory_space<vmem>>, vector<1x128xf32>
    %19 = arith.mulf %12, %12 : vector<4x128xf32>
    %cst_21 = arith.constant dense<0.000000e+00> : vector<128xf32>
    %20 = vector.multi_reduction <add>, %19, %cst_21 [0] : vector<4x128xf32> to vector<128xf32>
    %21 = vector.shape_cast %20 : vector<128xf32> to vector<1x128xf32>
    %22 = arith.addf %18, %21 : vector<1x128xf32>
    %c0_22 = arith.constant 0 : index
    %c0_23 = arith.constant 0 : index
    %23 = vector.load %arg10[%c0_22, %c0_23] : memref<1x128xf32, #tpu.memory_space<vmem>>, vector<1x128xf32>
    tpu.vector_store %arg10[%c0_22, %c0_23], %22 {strides = array<i32>} : memref<1x128xf32, #tpu.memory_space<vmem>>, vector<1x128xf32>,
    %c0_24 = arith.constant 0 : index
    %c0_25 = arith.constant 0 : index
    %24 = vector.load %arg9[%c0_24, %c0_25] : memref<1x128xf32, #tpu.memory_space<vmem>>, vector<1x128xf32>
    %c0_26 = arith.constant 0 : index
    %c0_27 = arith.constant 0 : index
    %25 = vector.load %arg10[%c0_26, %c0_27] : memref<1x128xf32, #tpu.memory_space<vmem>>, vector<1x128xf32>
    %c64_i32 = arith.constant 64 : i32
    %26 = tpu.dynamic_rotate %24 by %c64_i32 dim 1 : vector<1x128xf32>, i32 -> vector<1x128xf32>
    %27 = arith.addf %24, %26 : vector<1x128xf32>
    %c64_i32_28 = arith.constant 64 : i32
    %28 = tpu.dynamic_rotate %25 by %c64_i32_28 dim 1 : vector<1x128xf32>, i32 -> vector<1x128xf32>
    %29 = arith.addf %25, %28 : vector<1x128xf32>
    %c32_i32 = arith.constant 32 : i32
    %30 = tpu.dynamic_rotate %27 by %c32_i32 dim 1 : vector<1x128xf32>, i32 -> vector<1x128xf32>
    %31 = arith.addf %27, %30 : vector<1x128xf32>
    %c32_i32_29 = arith.constant 32 : i32
    %32 = tpu.dynamic_rotate %29 by %c32_i32_29 dim 1 : vector<1x128xf32>, i32 -> vector<1x128xf32>
    %33 = arith.addf %29, %32 : vector<1x128xf32>
    %c0_30 = arith.constant 0 : index
    %34 = memref.load %arg1[%c0_30] : memref<1xi32, #tpu.memory_space<smem>>
    %35 = arith.sitofp %34 : i32 to f32
    %cst_31 = arith.constant 1.600000e+01 : f32
    %36 = arith.addf %35, %cst_31 : f32
    %c0_32 = arith.constant 0 : index
    %c0_33 = arith.constant 0 : index
    %37 = vector.load %arg2[%c0_32, %c0_33] : memref<1x128xf32, #tpu.memory_space<vmem>>, vector<1x128xf32>
    %cst_34 = arith.constant 1.600000e+01 : f32
    %38 = vector.broadcast %cst_34 : f32 to vector<1x128xf32>
    %39 = arith.mulf %38, %37 : vector<1x128xf32>
    %40 = arith.subf %31, %39 : vector<1x128xf32>
    %41 = vector.broadcast %36 : f32 to vector<1x128xf32>
    %42 = arith.divf %40, %41 : vector<1x128xf32>
    %43 = arith.addf %37, %42 : vector<1x128xf32>
    %c0_35 = arith.constant 0 : index
    %c0_36 = arith.constant 0 : index
    %44 = vector.load %arg3[%c0_35, %c0_36] : memref<1x128xf32, #tpu.memory_space<vmem>>, vector<1x128xf32>
    %45 = arith.addf %44, %33 : vector<1x128xf32>
    %46 = arith.addf %43, %37 : vector<1x128xf32>
    %47 = arith.mulf %46, %31 : vector<1x128xf32>
    %48 = arith.subf %45, %47 : vector<1x128xf32>
    %cst_37 = arith.constant 1.600000e+01 : f32
    %49 = vector.broadcast %cst_37 : f32 to vector<1x128xf32>
    %50 = arith.mulf %49, %37 : vector<1x128xf32>
    %51 = arith.mulf %50, %43 : vector<1x128xf32>
    %52 = arith.addf %48, %51 : vector<1x128xf32>
    %c0_38 = arith.constant 0 : index
    %c0_39 = arith.constant 0 : index
    %53 = vector.load %arg6[%c0_38, %c0_39] : memref<1x128xf32, #tpu.memory_space<vmem>>, vector<1x128xf32>
    tpu.vector_store %arg6[%c0_38, %c0_39], %43 {strides = array<i32>} : memref<1x128xf32, #tpu.memory_space<vmem>>, vector<1x128xf32>,
    %c0_40 = arith.constant 0 : index
    %c0_41 = arith.constant 0 : index
    %54 = vector.load %arg7[%c0_40, %c0_41] : memref<1x128xf32, #tpu.memory_space<vmem>>, vector<1x128xf32>
    tpu.vector_store %arg7[%c0_40, %c0_41], %52 {strides = array<i32>} : memref<1x128xf32, #tpu.memory_space<vmem>>, vector<1x128xf32>,
    %cst_42 = arith.constant 1.000000e+00 : f32
    %55 = arith.maximumf %36, %cst_42 : f32
    %56 = vector.broadcast %55 : f32 to vector<1x128xf32>
    %57 = arith.divf %52, %56 : vector<1x128xf32>
    %cst_43 = arith.constant 9.99999974E-6 : f32
    %58 = vector.broadcast %cst_43 : f32 to vector<1x128xf32>
    %59 = arith.addf %57, %58 : vector<1x128xf32>
    %cst_44 = arith.constant 9.99999993E-9 : f32
    %60 = vector.broadcast %cst_44 : f32 to vector<1x128xf32>
    %61 = arith.maximumf %59, %60 : vector<1x128xf32>
    %62 = math.rsqrt %61 : vector<1x128xf32>
    %cst_45 = arith.constant 2.000000e+00 : f32
    %63 = arith.cmpf oge, %36, %cst_45 : f32
    %cst_46 = arith.constant 0.000000e+00 : f32
    %64 = vector.broadcast %cst_46 : f32 to vector<1x128xf32>
    %65 = arith.select %63, %43, %64 : vector<1x128xf32>
    %cst_47 = arith.constant 1.000000e+00 : f32
    %66 = vector.broadcast %cst_47 : f32 to vector<1x128xf32>
    %67 = arith.select %63, %62, %66 : vector<1x128xf32>
    %c0_48 = arith.constant 0 : index
    %c0_49 = arith.constant 0 : index
    %68 = vector.load %arg8[%c0_48, %c0_49] : memref<8x128xf32, #tpu.memory_space<vmem>>, vector<4x128xf32>
    %69 = vector.broadcast %65 : vector<1x128xf32> to vector<4x128xf32>
    %70 = arith.subf %68, %69 : vector<4x128xf32>
    %71 = vector.broadcast %67 : vector<1x128xf32> to vector<4x128xf32>
    %72 = arith.mulf %70, %71 : vector<4x128xf32>
    %c0_50 = arith.constant 0 : index
    %c0_51 = arith.constant 0 : index
    %73 = vector.load %arg8[%c0_50, %c0_51] : memref<8x128xf32, #tpu.memory_space<vmem>>, vector<4x128xf32>
    tpu.vector_store %arg8[%c0_50, %c0_51], %72 {strides = array<i32>} : memref<8x128xf32, #tpu.memory_space<vmem>>, vector<4x128xf32>,
    %c2_i32_52 = arith.constant 2 : i32
    %c0_i32_53 = arith.constant 0 : i32
    %c0_i32_54 = arith.constant 0 : i32
    %74 = tpu.memref_slice %arg8[%c0_i32_53, %c0_i32_54] : memref<8x128xf32, #tpu.memory_space<vmem>> -> memref<4x128xf32, #tpu.memory_space<vmem>>
    %c0_i32_55 = arith.constant 0 : i32
    %c0_i32_56 = arith.constant 0 : i32
    %75 = tpu.memref_slice %arg5[%c0_i32_55, %c0_i32_56] : memref<4x128xf32, #tpu.memory_space<any>> -> memref<4x128xf32, #tpu.memory_space<any>>
    %76 = tpu.memref_slice %arg11[%c2_i32_52] : memref<3x!tpu.dma_semaphore, #tpu.memory_space<semaphore_mem>> -> memref<1x!tpu.dma_semaphore, #tpu.memory_space<semaphore_mem>>
    %77 = tpu.memref_squeeze %76 : memref<1x!tpu.dma_semaphore, #tpu.memory_space<semaphore_mem>> -> memref<!tpu.dma_semaphore, #tpu.memory_space<semaphore_mem>>
    tpu.enqueue_dma source(%74 : memref<4x128xf32, #tpu.memory_space<vmem>>) target(%75 : memref<4x128xf32, #tpu.memory_space<any>>) target_semaphore(%77 : memref<!tpu.dma_semaphore, #tpu.memory_space<semaphore_mem>>)
    %c2_i32_57 = arith.constant 2 : i32
    %c0_i32_58 = arith.constant 0 : i32
    %c0_i32_59 = arith.constant 0 : i32
    %78 = tpu.memref_slice %arg8[%c0_i32_58, %c0_i32_59] : memref<8x128xf32, #tpu.memory_space<vmem>> -> memref<4x128xf32, #tpu.memory_space<vmem>>
    %c0_i32_60 = arith.constant 0 : i32
    %c0_i32_61 = arith.constant 0 : i32
    %79 = tpu.memref_slice %arg5[%c0_i32_60, %c0_i32_61] : memref<4x128xf32, #tpu.memory_space<any>> -> memref<4x128xf32, #tpu.memory_space<any>>
    %80 = tpu.memref_slice %arg11[%c2_i32_57] : memref<3x!tpu.dma_semaphore, #tpu.memory_space<semaphore_mem>> -> memref<1x!tpu.dma_semaphore, #tpu.memory_space<semaphore_mem>>
    %81 = tpu.memref_squeeze %80 : memref<1x!tpu.dma_semaphore, #tpu.memory_space<semaphore_mem>> -> memref<!tpu.dma_semaphore, #tpu.memory_space<semaphore_mem>>
    tpu.wait_dma2 semaphore(%81 : memref<!tpu.dma_semaphore, #tpu.memory_space<semaphore_mem>>) src(%78 : memref<4x128xf32, #tpu.memory_space<vmem>>) dst(%79 : memref<4x128xf32, #tpu.memory_space<any>>)
    return
  }
  func.func @transform_0(%arg0: i32, %arg1: memref<1xi32, #tpu.memory_space<smem>>) -> (i32, i32) {
    %c0_i32 = arith.constant 0 : i32
    %c0_i32_0 = arith.constant 0 : i32
    %c0_i32_1 = arith.constant 0 : i32
    return %c0_i32, %c0_i32_0 : i32, i32
  }
  func.func @transform_1(%arg0: i32, %arg1: memref<1xi32, #tpu.memory_space<smem>>) -> (i32, i32) {
    %c0_i32 = arith.constant 0 : i32
    %c0_i32_0 = arith.constant 0 : i32
    %c0_i32_1 = arith.constant 0 : i32
    return %c0_i32, %c0_i32_0 : i32, i32
  }
  func.func @transform_4(%arg0: i32, %arg1: memref<1xi32, #tpu.memory_space<smem>>) -> (i32, i32) {
    %c0_i32 = arith.constant 0 : i32
    %c0_i32_0 = arith.constant 0 : i32
    %c0_i32_1 = arith.constant 0 : i32
    return %c0_i32, %c0_i32_0 : i32, i32
  }
  func.func @transform_5(%arg0: i32, %arg1: memref<1xi32, #tpu.memory_space<smem>>) -> (i32, i32) {
    %c0_i32 = arith.constant 0 : i32
    %c0_i32_0 = arith.constant 0 : i32
    %c0_i32_1 = arith.constant 0 : i32
    return %c0_i32, %c0_i32_0 : i32, i32
  }
}

</mosaic_0001>

<llo_original>
// kernel: tpu_custom_call.1
$region0: #{tpu_custom_call.1}
  #allocation0 [shape = 'u32[]', space=smem, size = 0x4, offset = 0x4, fixed_abs, tag = 'smem constant byte address 0x4 - core index']
  #allocation1 [shape = 'u32[144,128]{1,0:T(1,128)}', space=vmem, size = 0x12000, scoped, tag = 'internal scratch']
  #allocation2 [shape = 'f32[8,128]{1,0:T(8,128)}', space=vmem, size = 0x1000, scoped, tag = 'scratch operand']
  #allocation3 [shape = 'f32[1,128]{1,0:T(1,128)}', space=vmem, size = 0x200, scoped, tag = 'scratch operand']
  #allocation4 [shape = 'f32[1,128]{1,0:T(1,128)}', space=vmem, size = 0x200, scoped, tag = 'scratch operand']
  #allocation5 [shape = 's32[3]{0}', space=sflag, size = 0xc, scoped, tag = 'scratch operand']
  #allocation6 [shape = 's32[1]{0}', space=sflag, size = 0x4, scoped, tag = 'scoped memory for tpu_custom_call.1']
  #allocation7 [shape = 's32[1]{0:T(128)S(6)}', space=smem, size = 0x200, scoped, tag = 'prefetched SMEM operand 0']
  #allocation12 [shape = 's32[]', space=sflag, size = 0x4, offset = 0, fixed_abs, tag = 'sflag constant byte address 0x0 - dummy sync flag']
  #allocation13 [shape = 's32[]', space=sflag, size = 0x4, offset = 0, fixed_abs, tag = 'sflag constant byte address 0x0 - dummy sync flag']
  #allocation14 [shape = 's32[]', space=sflag, size = 0x4, offset = 0, fixed_abs, tag = 'sflag constant byte address 0x0 - dummy sync flag']
  #allocation15 [shape = 'u32[]', space=smem, size = 0x4, offset = 0x44, fixed_abs, tag = 'smem constant byte address 0x44 - assertion arg 0']
  #allocation16 [shape = 'u32[]', space=smem, size = 0x4, offset = 0x48, fixed_abs, tag = 'smem constant byte address 0x48 - assertion arg 1']
  %s0 = inlined_call_operand.<no memory space> [shape: s32[1], index: 0, kind: input, shape index: {}]
  %s1 = inlined_call_operand.vmem [shape: f32[1,128], index: 1, kind: input, shape index: {}]
  %s2 = inlined_call_operand.vmem [shape: f32[1,128], index: 2, kind: input, shape index: {}]
  %s3 = inlined_call_operand.vmem [shape: f32[4,128], index: 3, kind: input, shape index: {}]
  %s4 = inlined_call_operand.hbm [shape: f32[4,128], index: 4, kind: output, shape index: {0}]
  %s5 = inlined_call_operand.hbm [shape: f32[1,128], index: 5, kind: output, shape index: {1}]
  %s6 = inlined_call_operand.hbm [shape: f32[1,128], index: 6, kind: output, shape index: {2}]
  %7 = xla_tuple %s4, %s5, %s6
  %s8 = sld [smem:[#allocation0]]
  $region60: #{tpu_custom_call.1} parent=0
    _
  %s10 = ssub.s32 1, %s8
  %s11 = scalar_select 0, %s10, %s8
  %12 = sst [smem:[#allocation7]] %s0
  $region1: #{tpu_custom_call.1} parent=0
    #allocation8 [shape = 'u8[512]{0}', space=vmem, size = 0x400, scoped, tag = 'output window, operand 1, single buffered']
    #allocation9 [shape = 's32[1]{0}', space=sflag, size = 0x4, scoped, tag = 'scoped memory for tpu_custom_call.1']
    #allocation10 [shape = 'u8[512]{0}', space=vmem, size = 0x400, scoped, tag = 'output window, operand 2, single buffered']
    #allocation11 [shape = 's32[1]{0}', space=sflag, size = 0x4, scoped, tag = 'scoped memory for tpu_custom_call.1']
    %13 = vsyncpa [#allocation9], 0
    %14 = vsyncpa [#allocation11], 0
    // Predicated region
    $region2: #{tpu_custom_call.1} parent=1 // pred_check
      _
    $region3: #{tpu_custom_call.1} parent=1 // pred_check_branch
      %16 = sbr.rel (0) target = $region5
    $region4: #{tpu_custom_call.1} parent=1 // pred_region
      _
    $region5: #{tpu_custom_call.1} parent=1 // pred_fallthru
      _
    // Predicated region
    $region6: #{tpu_custom_call.1} parent=1 // pred_check
      _
    $region7: #{tpu_custom_call.1} parent=1 // pred_check_branch
      %18 = sbr.rel (0) target = $region9
    $region8: #{tpu_custom_call.1} parent=1 // pred_region
      _
    $region9: #{tpu_custom_call.1} parent=1 // pred_fallthru
      _
    %s19 = scalar_lea.sflag [#allocation5], 2
    %p21 = scmp.lt.u32.totalorder 4, 8
    %p22 = pneg %p21
    // Predicated region
    $region10: #{tpu_custom_call.1} parent=1 // pred_check
      _
    $region11: #{tpu_custom_call.1} parent=1 // pred_check_branch
      %24 = sbr.rel (%p21) target = $region13
    $region12: #{tpu_custom_call.1} parent=1 // pred_region
      %s39 = sand.u32 4, 7
      %p40 = scmp.eq.s32.totalorder %s39, 0
      %p41 = pneg %p40
      // Predicated region
      $region25: #{tpu_custom_call.1} parent=12 // pred_check
        _
      $region26: #{tpu_custom_call.1} parent=12 // pred_check_branch
        %43 = sbr.rel (%p40) target = $region28
      $region27: #{tpu_custom_call.1} parent=12 // pred_region
        %s44 = sand.u32 4, 7
        %s45 = ssub.s32 4, %s44
        %s46 = scalar_lea.vmem %s3, %s45
        %s47 = ssub.s32 4, %s44
        %s48 = scalar_lea.vmem [#allocation2], %s47
        %s49 = sshllo.u32 0, %s44
        loop: start=0, step=1, limit=1
        $region29: #{tpu_custom_call.1} parent=27 // loop_pre_header
          _
        $region30: #{tpu_custom_call.1} parent=27 // loop_header
          %s51 = sphi 0, %s55
          %p52 = scmp.ge.s32.totalorder %s51, 1
          %s56 = sphi %s46, %s46
          %s57 = sphi %s48, %s48
        $region31: #{tpu_custom_call.1} parent=27 // loop_header_branch
          %54 = sbr.rel (%p52) target = $region35
        $region32: #{tpu_custom_call.1} parent=27 // loop_body
          %v58 = vld [vmem:[%s56] sm:%s49]
          %59 = vst [vmem:[%s57] sm:%s49] %v58
        $region33: #{tpu_custom_call.1} parent=27 // loop_footer
          %s55 = sadd.s32 1, %s51
        $region34: #{tpu_custom_call.1} parent=27 // loop_footer_branch
          %50 = sbr.rel target = $region30
        $region35: #{tpu_custom_call.1} parent=27 // loop_exit
          _
      $region28: #{tpu_custom_call.1} parent=12 // pred_fallthru
        _
    $region13: #{tpu_custom_call.1} parent=1 // pred_fallthru
      _
    // Predicated region
    $region14: #{tpu_custom_call.1} parent=1 // pred_check
      %p25 = pneg %p21
    $region15: #{tpu_custom_call.1} parent=1 // pred_check_branch
      %27 = sbr.rel (%p25) target = $region17
    $region16: #{tpu_custom_call.1} parent=1 // pred_region
      %s28 = sshllo.u32 0, 4
      loop: start=0, step=1, limit=1
      $region18: #{tpu_custom_call.1} parent=16 // loop_pre_header
        _
      $region19: #{tpu_custom_call.1} parent=16 // loop_header
        %s30 = sphi 0, %s34
        %p31 = scmp.ge.s32.totalorder %s30, 1
        %s35 = sphi %s3, %s3
        %s36 = sphi [#allocation2], [#allocation2]
      $region20: #{tpu_custom_call.1} parent=16 // loop_header_branch
        %33 = sbr.rel (%p31) target = $region24
      $region21: #{tpu_custom_call.1} parent=16 // loop_body
        %v37 = vld [vmem:[%s35] sm:%s28]
        %38 = vst [vmem:[%s36] sm:%s28] %v37
      $region22: #{tpu_custom_call.1} parent=16 // loop_footer
        %s34 = sadd.s32 1, %s30
      $region23: #{tpu_custom_call.1} parent=16 // loop_footer_branch
        %29 = sbr.rel target = $region19
      $region24: #{tpu_custom_call.1} parent=16 // loop_exit
        _
    $region17: #{tpu_custom_call.1} parent=1 // pred_fallthru
      _
    // Predicated region
    $region36: #{tpu_custom_call.1} parent=1 // pred_check
      _
    $region37: #{tpu_custom_call.1} parent=1 // pred_check_branch
      %62 = sbr.rel (0) target = $region39
    $region38: #{tpu_custom_call.1} parent=1 // pred_region
      %63 = vsyncadd %s19, 64
    $region39: #{tpu_custom_call.1} parent=1 // pred_fallthru
      _
    %64 = vst [vmem:[#allocation3] sm:$0x1] 0.0
    %65 = vst [vmem:[#allocation4] sm:$0x1] 0.0
    %s66 = smul.u32 4, 1
    %s67 = sshll.u32 %s66, 4
    %68 = dma.done %s19, %s67
    %v69 = vld [vmem:[#allocation2] sm:$0xf]
    %v70 = vld [vmem:[#allocation3] sm:$0x1]
    %vm71 = vcmask 1043456
    %v72 = vsel %vm71, %v69, 0.0
    %v73 = vrot.slane %v72, 4
    %v74 = vadd.f32 %v72, %v73
    %v75 = vrot.slane %v74, 2
    %v76 = vadd.f32 %v74, %v75
    %v77 = vrot.slane %v76, 1
    %v78 = vadd.f32 %v76, %v77
    %v79 = vadd.f32 %v70, %v78
    %80 = vst [vmem:[#allocation3] sm:$0x1] %v79
    %v81 = vld [vmem:[#allocation4] sm:$0x1]
    %v82 = vmul.f32 %v69, %v69
    %v83 = vsel %vm71, %v82, 0.0
    %v84 = vrot.slane %v83, 4
    %v85 = vadd.f32 %v83, %v84
    %v86 = vrot.slane %v85, 2
    %v87 = vadd.f32 %v85, %v86
    %v88 = vrot.slane %v87, 1
    %v89 = vadd.f32 %v87, %v88
    %v90 = vadd.f32 %v81, %v89
    %91 = vst [vmem:[#allocation4] sm:$0x1] %v90
    %v92 = vld [vmem:[#allocation3] sm:$0x1]
    %v93 = vld [vmem:[#allocation4] sm:$0x1]
    %94 = vrot.lane.b32.xlu0 %v92, 64
    %v95 = vpop.permute.xlu0 %94
    %v96 = vadd.f32 %v92, %v95
    %97 = vrot.lane.b32.xlu0 %v93, 64
    %v98 = vpop.permute.xlu0 %97
    %v99 = vadd.f32 %v93, %v98
    %100 = vrot.lane.b32.xlu0 %v96, 32
    %v101 = vpop.permute.xlu0 %100
    %v102 = vadd.f32 %v96, %v101
    %103 = vrot.lane.b32.xlu0 %v99, 32
    %v104 = vpop.permute.xlu0 %103
    %v105 = vadd.f32 %v99, %v104
    %s106 = sld [smem:[#allocation7]]
    %s107 = scvt.s32.f32 %s106
    %s108 = sadd.f32 %s107, 16.0
    %v109 = vld [vmem:[%s1] sm:$0x1]
    %v110 = vmul.f32 %v109, 16.0
    %v111 = vsub.f32 %v102, %v110
    %v112 = vstv %s108
    %v113 = vrcp.pop %v112
    %v114 = vmul.f32 %v111, %v113
    %v115 = vadd.f32 %v109, %v114
    %v116 = vld [vmem:[%s2] sm:$0x1]
    %v117 = vadd.f32 %v116, %v105
    %v118 = vadd.f32 %v115, %v109
    %v119 = vmul.f32 %v118, %v102
    %v120 = vsub.f32 %v117, %v119
    %v121 = vmul.f32 %v110, %v115
    %v122 = vadd.f32 %v120, %v121
    %123 = vst [vmem:[#allocation8] sm:$0x1] %v115
    %124 = vst [vmem:[#allocation10] sm:$0x1] %v122
    %s125 = smax.f32 %s108, 1.0
    %v126 = vstv %s125
    %v127 = vrcp.pop %v126
    %v128 = vmul.f32 %v122, %v127
    %v129 = vadd.f32 %v128, 1e-05
    %v130 = vmax.f32 %v129, 1e-08
    %v131 = vrsqrt.pop %v130
    %p132 = scmp.ge.f32.partialorder %s108, 2.0
    %s133 = scalar_select %p132, 1, 0
    %v134 = vstv %s133
    %vm135 = vcmp.eq.s32.totalorder %v134, 1
    %v136 = vsel %vm135, %v115, 0.0
    %v137 = vsel %vm135, %v131, 1.0
    %v138 = vld [vmem:[#allocation2] sm:$0xf]
    %v140 = vlaneseq
    %v141 = vshrl.u32 %v140, 7
    %v142 = vsub.s32 0, %v141
    %v143 = vrot.slane %v136, %v142
    %v145 = vsub.f32 %v138, %v143
    %v147 = vlaneseq
    %v148 = vshrl.u32 %v147, 7
    %v149 = vsub.s32 0, %v148
    %v150 = vrot.slane %v137, %v149
    %v152 = vmul.f32 %v145, %v150
    %153 = vst [vmem:[#allocation2] sm:$0xf] %v152
    // Predicated region
    $region40: #{tpu_custom_call.1} parent=1 // pred_check
      _
    $region41: #{tpu_custom_call.1} parent=1 // pred_check_branch
      %155 = sbr.rel target = $region43
    $region42: #{tpu_custom_call.1} parent=1 // pred_region
      %156 = sst [smem:[#allocation15]] [#allocation14]
      %157 = sst [smem:[#allocation16]] [#allocation13]
    $region43: #{tpu_custom_call.1} parent=1 // pred_fallthru
      _
    %159 = shalt.err (0)
    %s161 = sshll.u32 [#allocation2], 4
    %s162 = int_to_ptr.vmem [resolvable:$true] %s161
    %164 = dma.vmem_to_hbm [thread:$0]  %s162, 64, %s4, %s19
    %s165 = sshll.u32 %s66, 4
    %166 = dma.done %s19, %s165
    // Predicated region
    $region44: #{tpu_custom_call.1} parent=1 // pred_check
      _
    $region45: #{tpu_custom_call.1} parent=1 // pred_check_branch
      %168 = sbr.rel (0) target = $region47
    $region46: #{tpu_custom_call.1} parent=1 // pred_region
      %s170 = ssub.s32 16, 16
      %171 = vsyncadd [#allocation9], %s170
      %s173 = sshll.u32 [#allocation8], 4
      %s174 = int_to_ptr.vmem [resolvable:$true] %s173
      %176 = dma.vmem_to_hbm [thread:$0]  %s174, 16, %s5, [#allocation9]
    $region47: #{tpu_custom_call.1} parent=1 // pred_fallthru
      _
    // Predicated region
    $region48: #{tpu_custom_call.1} parent=1 // pred_check
      _
    $region49: #{tpu_custom_call.1} parent=1 // pred_check_branch
      %178 = sbr.rel (0) target = $region51
    $region50: #{tpu_custom_call.1} parent=1 // pred_region
      %s180 = ssub.s32 16, 16
      %181 = vsyncadd [#allocation11], %s180
      %s183 = sshll.u32 [#allocation10], 4
      %s184 = int_to_ptr.vmem [resolvable:$true] %s183
      %186 = dma.vmem_to_hbm [thread:$0]  %s184, 16, %s6, [#allocation11]
    $region51: #{tpu_custom_call.1} parent=1 // pred_fallthru
      _
    // Predicated region
    $region52: #{tpu_custom_call.1} parent=1 // pred_check
      _
    $region53: #{tpu_custom_call.1} parent=1 // pred_check_branch
      %188 = sbr.rel (0) target = $region55
    $region54: #{tpu_custom_call.1} parent=1 // pred_region
      %189 = dma.done [#allocation9], 16
    $region55: #{tpu_custom_call.1} parent=1 // pred_fallthru
      _
    // Predicated region
    $region56: #{tpu_custom_call.1} parent=1 // pred_check
      _
    $region57: #{tpu_custom_call.1} parent=1 // pred_check_branch
      %191 = sbr.rel (0) target = $region59
    $region58: #{tpu_custom_call.1} parent=1 // pred_region
      %192 = dma.done [#allocation11], 16
    $region59: #{tpu_custom_call.1} parent=1 // pred_fallthru
      _
    %193 = vsyncpa [#allocation9], 1
    %194 = vsyncpa [#allocation11], 1
  %195 = vsyncmov [#allocation5]
  %s196 = vpop.sfrf %195
  %p197 = scmp.eq.s32.totalorder %s196, 0
  %p198 = pneg %p197
  %200 = shalt.err (%p198)
  %s201 = scalar_lea.sflag [#allocation5], 1
  %202 = vsyncmov %s201
  %s203 = vpop.sfrf %202
  %p204 = scmp.eq.s32.totalorder %s203, 0
  %p205 = pneg %p204
  %207 = shalt.err (%p205)
  %s208 = scalar_lea.sflag [#allocation5], 2
  %209 = vsyncmov %s208
  %s210 = vpop.sfrf %209
  %p211 = scmp.eq.s32.totalorder %s210, 0
  %p212 = pneg %p211
  %214 = shalt.err (%p212)

</llo_original>
